<compile_context>
chip_gen: v7x
topology: tpu7x:2x2x1
jax: 0.10.0
libtpu: 0.0.40
codegen_flags: <defaults>
</compile_context>

<pallas_src>
import functools

import jax
import jax.numpy as jnp
from jax.experimental import pallas as pl
from jax.experimental.pallas import tpu as pltpu


def _round_up(n, m):
    return ((n + m - 1) // m) * m


def mlp_kernel(x_ref, w1_ref, w2_ref, w3_ref, w4_ref, b_ref, o_ref,
               *, output_dim, act_dtype):
    # Weights/biases are VMEM-resident (constant index_map); only the x tile
    # and the narrow output tile move per grid step.
    b = b_ref[...]                                   # (4, P) f32 bias slab
    x = x_ref[...].astype(jnp.bfloat16)              # bf16 MXU input

    # Layer 1..3: MXU dot (f32 acc) -> f32 bias add -> cast to act_dtype -> ReLU.
    h = jnp.dot(x, w1_ref[...], preferred_element_type=jnp.float32)
    h = jnp.maximum((h + b[0:1]).astype(act_dtype), 0)

    h = jnp.dot(h.astype(jnp.bfloat16), w2_ref[...],
                preferred_element_type=jnp.float32)
    h = jnp.maximum((h + b[1:2]).astype(act_dtype), 0)

    h = jnp.dot(h.astype(jnp.bfloat16), w3_ref[...],
                preferred_element_type=jnp.float32)
    h = jnp.maximum((h + b[2:3]).astype(act_dtype), 0)

    h = jnp.dot(h.astype(jnp.bfloat16), w4_ref[...],
                preferred_element_type=jnp.float32) + b[3:4]

    # Only the real output columns are activated and stored (narrow writeback).
    z = h[:, :output_dim]
    o_ref[...] = pl.reciprocal(1.0 + jnp.exp(-z), approx=True)


def init_params(key, input_dim, output_dim):
    """Raw params mimicking nn.Linear init: list of (W(fan_in,fan_out), b(fan_out,))."""
    dims = [(input_dim, 64), (64, 32), (32, 16), (16, output_dim)]
    keys = jax.random.split(key, 2 * len(dims))
    raw = []
    for i, (fan_in, fan_out) in enumerate(dims):
        bound = 1.0 / jnp.sqrt(jnp.float32(fan_in))
        w = jax.random.uniform(keys[2 * i], (fan_in, fan_out),
                               minval=-bound, maxval=bound, dtype=jnp.float32)
        b = jax.random.uniform(keys[2 * i + 1], (fan_out,),
                               minval=-bound, maxval=bound, dtype=jnp.float32)
        raw.append((w, b))
    return raw


def pack_params(raw, input_dim, output_dim):
    """Zero-pad hidden widths to a lane-dense 128 multiple, cast W to bf16,
    stack the 4 biases into one (4, P) f32 slab."""
    P = _round_up(max(64, output_dim), 128)
    (w1, b1), (w2, b2), (w3, b3), (w4, b4) = raw

    def padw(w, rows, cols):
        out = jnp.zeros((rows, cols), jnp.float32)
        out = out.at[:w.shape[0], :w.shape[1]].set(w)
        return out.astype(jnp.bfloat16)

    packed = {
        "w1": padw(w1, input_dim, P),
        "w2": padw(w2, P, P),
        "w3": padw(w3, P, P),
        "w4": padw(w4, P, P),
        "pad_width": P,
    }
    b_all = jnp.zeros((4, P), jnp.float32)
    for i, b in enumerate((b1, b2, b3, b4)):
        b_all = b_all.at[i, : b.shape[0]].set(b)
    packed["b"] = b_all
    return packed


def _choose_tile(B, tb_max, align=16):
    """Batch tile: multiple of `align`, as large as tb_max allows, but prefer a
    grid of >=2 steps so "parallel" can shard across v7x's two TensorCores."""
    tb_max = max(align, (tb_max // align) * align)
    B_r = _round_up(B, align)
    TB = min(tb_max, B_r)
    if B_r >= 2 * align and TB >= B_r:
        TB = _round_up(-(-B_r // 2), align)          # ceil(B_r/2), aligned
    B_pad = _round_up(B_r, TB)
    return TB, B_pad


def mlp_forward(x, packed, output_dim, *, tb_max=4096, act_dtype=jnp.bfloat16):
    """x: (B, input_dim) f32 -> (B, output_dim) f32.
    On v5e pass act_dtype=jnp.float32 (no bf16 VPU there)."""
    B, input_dim = x.shape

    TB, B_pad = _choose_tile(B, tb_max)
    if B_pad != B:
        x = jnp.pad(x, ((0, B_pad - B), (0, 0)))
    grid = (B_pad // TB,)

    def const_spec(shape):
        return pl.BlockSpec(shape, lambda i: (0, 0))

    in_specs = [
        pl.BlockSpec((TB, input_dim), lambda i: (i, 0)),  # x streams per step
        const_spec(packed["w1"].shape),                   # weights stay resident
        const_spec(packed["w2"].shape),
        const_spec(packed["w3"].shape),
        const_spec(packed["w4"].shape),
        const_spec(packed["b"].shape),
    ]

    kernel = functools.partial(mlp_kernel, output_dim=output_dim,
                               act_dtype=act_dtype)

    out = pl.pallas_call(
        kernel,
        out_shape=jax.ShapeDtypeStruct((B_pad, output_dim), jnp.float32),
        grid_spec=pltpu.PrefetchScalarGridSpec(
            num_scalar_prefetch=0,
            grid=grid,
            in_specs=in_specs,
            # last block dim == full array dim -> legal sub-128 block
            out_specs=pl.BlockSpec((TB, output_dim), lambda i: (i, 0)),
        ),
        compiler_params=pltpu.CompilerParams(
            dimension_semantics=("parallel",)),
    )(x, packed["w1"], packed["w2"], packed["w3"], packed["w4"], packed["b"])

    return out[:B]


def ref_forward(x, raw):
    """Plain-JAX f32 reference with identical semantics to the PyTorch module."""
    h = x
    for i, (w, b) in enumerate(raw):
        h = h @ w + b
        if i < 3:
            h = jnp.maximum(h, 0.0)
    return jax.nn.sigmoid(h)


if __name__ == "__main__":
    key = jax.random.PRNGKey(0)
    k_x, k_p, k_x2 = jax.random.split(key, 3)

    INPUT_DIM, OUTPUT_DIM = 32, 8
    raw = init_params(k_p, INPUT_DIM, OUTPUT_DIM)
    packed = pack_params(raw, INPUT_DIM, OUTPUT_DIM)

    # Small single-tile case (grid = (1,))
    B = 8
    x = jax.random.normal(k_x, (B, INPUT_DIM), dtype=jnp.float32)
    out = jax.block_until_ready(mlp_forward(x, packed, OUTPUT_DIM))
    ref = ref_forward(x, raw)
    assert out.shape == (B, OUTPUT_DIM)
    assert jnp.allclose(out, ref, atol=2e-2, rtol=2e-2), "single-tile mismatch"

    # Multi-step grid case (exercise batch tiling: tb_max=16 -> grid=(2,))
    B2 = 24
    x2 = jax.random.normal(k_x2, (B2, INPUT_DIM), dtype=jnp.float32)
    out2 = jax.block_until_ready(mlp_forward(x2, packed, OUTPUT_DIM, tb_max=16))
    ref2 = ref_forward(x2, raw)
    assert out2.shape == (B2, OUTPUT_DIM)
    assert jnp.allclose(out2, ref2, atol=2e-2, rtol=2e-2), "tiled-grid mismatch"

    print("KERNEL_OK")
</pallas_src>

<mosaic_0001>
module attributes {stable_mosaic.version = 11 : i64} {
  func.func @mlp_kernel(%arg0: i32, %arg1: memref<16x32xf32, #tpu.memory_space<vmem>>, %arg2: memref<32x128xbf16, #tpu.memory_space<vmem>>, %arg3: memref<128x128xbf16, #tpu.memory_space<vmem>>, %arg4: memref<128x128xbf16, #tpu.memory_space<vmem>>, %arg5: memref<128x128xbf16, #tpu.memory_space<vmem>>, %arg6: memref<4x128xf32, #tpu.memory_space<vmem>>, %arg7: memref<16x8xf32, #tpu.memory_space<vmem>>) attributes {dimension_semantics = [#tpu.dimension_semantics<parallel>], iteration_bounds = array<i64: 1>, scalar_prefetch = 0 : i64, scratch_operands = 0 : i64, tpu.core_type = #tpu.core_type<tc>, window_params = [{transform_indices = @transform_0, window_bounds = array<i64: 16, 32>}, {pipeline_mode = #tpu.pipeline_mode<synchronous>, transform_indices = @transform_1, window_bounds = array<i64: 32, 128>}, {pipeline_mode = #tpu.pipeline_mode<synchronous>, transform_indices = @transform_2, window_bounds = array<i64: 128, 128>}, {pipeline_mode = #tpu.pipeline_mode<synchronous>, transform_indices = @transform_3, window_bounds = array<i64: 128, 128>}, {pipeline_mode = #tpu.pipeline_mode<synchronous>, transform_indices = @transform_4, window_bounds = array<i64: 128, 128>}, {pipeline_mode = #tpu.pipeline_mode<synchronous>, transform_indices = @transform_5, window_bounds = array<i64: 4, 128>}, {transform_indices = @transform_6, window_bounds = array<i64: 16, 8>}]} {
    %c0 = arith.constant 0 : index
    %c0_0 = arith.constant 0 : index
    %0 = vector.load %arg6[%c0, %c0_0] : memref<4x128xf32, #tpu.memory_space<vmem>>, vector<4x128xf32>
    %c0_1 = arith.constant 0 : index
    %c0_2 = arith.constant 0 : index
    %1 = vector.load %arg1[%c0_1, %c0_2] : memref<16x32xf32, #tpu.memory_space<vmem>>, vector<16x32xf32>
    %2 = arith.truncf %1 : vector<16x32xf32> to vector<16x32xbf16>
    %c0_3 = arith.constant 0 : index
    %c0_4 = arith.constant 0 : index
    %3 = vector.load %arg2[%c0_3, %c0_4] : memref<32x128xbf16, #tpu.memory_space<vmem>>, vector<32x128xbf16>
    %cst = arith.constant dense<0.000000e+00> : vector<16x128xf32>
    %4 = tpu.matmul %2, %3, %cst {dimension_numbers = #tpu.dot_dimension_numbers<[1], [0], [0], [1], [0, 0, 1, 1], [], []>} : vector<16x32xbf16>, vector<32x128xbf16>, vector<16x128xf32> -> vector<16x128xf32>
    %5 = vector.extract_strided_slice %0 {offsets = [0, 0], sizes = [1, 128], strides = [1, 1]} : vector<4x128xf32> to vector<1x128xf32>
    %6 = vector.broadcast %5 : vector<1x128xf32> to vector<16x128xf32>
    %7 = arith.addf %4, %6 : vector<16x128xf32>
    %8 = arith.truncf %7 : vector<16x128xf32> to vector<16x128xbf16>
    %cst_5 = arith.constant 0.000000e+00 : bf16
    %9 = vector.broadcast %cst_5 : bf16 to vector<16x128xbf16>
    %10 = arith.maximumf %8, %9 : vector<16x128xbf16>
    %c0_6 = arith.constant 0 : index
    %c0_7 = arith.constant 0 : index
    %11 = vector.load %arg3[%c0_6, %c0_7] : memref<128x128xbf16, #tpu.memory_space<vmem>>, vector<128x128xbf16>
    %cst_8 = arith.constant dense<0.000000e+00> : vector<16x128xf32>
    %12 = tpu.matmul %10, %11, %cst_8 {dimension_numbers = #tpu.dot_dimension_numbers<[1], [0], [0], [1], [0, 0, 1, 1], [], []>} : vector<16x128xbf16>, vector<128x128xbf16>, vector<16x128xf32> -> vector<16x128xf32>
    %13 = vector.extract_strided_slice %0 {offsets = [1, 0], sizes = [1, 128], strides = [1, 1]} : vector<4x128xf32> to vector<1x128xf32>
    %14 = vector.broadcast %13 : vector<1x128xf32> to vector<16x128xf32>
    %15 = arith.addf %12, %14 : vector<16x128xf32>
    %16 = arith.truncf %15 : vector<16x128xf32> to vector<16x128xbf16>
    %cst_9 = arith.constant 0.000000e+00 : bf16
    %17 = vector.broadcast %cst_9 : bf16 to vector<16x128xbf16>
    %18 = arith.maximumf %16, %17 : vector<16x128xbf16>
    %c0_10 = arith.constant 0 : index
    %c0_11 = arith.constant 0 : index
    %19 = vector.load %arg4[%c0_10, %c0_11] : memref<128x128xbf16, #tpu.memory_space<vmem>>, vector<128x128xbf16>
    %cst_12 = arith.constant dense<0.000000e+00> : vector<16x128xf32>
    %20 = tpu.matmul %18, %19, %cst_12 {dimension_numbers = #tpu.dot_dimension_numbers<[1], [0], [0], [1], [0, 0, 1, 1], [], []>} : vector<16x128xbf16>, vector<128x128xbf16>, vector<16x128xf32> -> vector<16x128xf32>
    %21 = vector.extract_strided_slice %0 {offsets = [2, 0], sizes = [1, 128], strides = [1, 1]} : vector<4x128xf32> to vector<1x128xf32>
    %22 = vector.broadcast %21 : vector<1x128xf32> to vector<16x128xf32>
    %23 = arith.addf %20, %22 : vector<16x128xf32>
    %24 = arith.truncf %23 : vector<16x128xf32> to vector<16x128xbf16>
    %cst_13 = arith.constant 0.000000e+00 : bf16
    %25 = vector.broadcast %cst_13 : bf16 to vector<16x128xbf16>
    %26 = arith.maximumf %24, %25 : vector<16x128xbf16>
    %c0_14 = arith.constant 0 : index
    %c0_15 = arith.constant 0 : index
    %27 = vector.load %arg5[%c0_14, %c0_15] : memref<128x128xbf16, #tpu.memory_space<vmem>>, vector<128x128xbf16>
    %cst_16 = arith.constant dense<0.000000e+00> : vector<16x128xf32>
    %28 = tpu.matmul %26, %27, %cst_16 {dimension_numbers = #tpu.dot_dimension_numbers<[1], [0], [0], [1], [0, 0, 1, 1], [], []>} : vector<16x128xbf16>, vector<128x128xbf16>, vector<16x128xf32> -> vector<16x128xf32>
    %29 = vector.extract_strided_slice %0 {offsets = [3, 0], sizes = [1, 128], strides = [1, 1]} : vector<4x128xf32> to vector<1x128xf32>
    %30 = vector.broadcast %29 : vector<1x128xf32> to vector<16x128xf32>
    %31 = arith.addf %28, %30 : vector<16x128xf32>
    %32 = vector.extract_strided_slice %31 {offsets = [0, 0], sizes = [16, 8], strides = [1, 1]} : vector<16x128xf32> to vector<16x8xf32>
    %cst_17 = arith.constant 0.000000e+00 : f32
    %33 = vector.broadcast %cst_17 : f32 to vector<16x8xf32>
    %34 = arith.subf %33, %32 : vector<16x8xf32>
    %35 = math.exp %34 : vector<16x8xf32>
    %cst_18 = arith.constant 1.000000e+00 : f32
    %36 = vector.broadcast %cst_18 : f32 to vector<16x8xf32>
    %37 = arith.addf %36, %35 : vector<16x8xf32>
    %38 = tpu.reciprocal %37 {approx = true} : vector<16x8xf32> -> vector<16x8xf32>
    %c0_19 = arith.constant 0 : index
    %c0_20 = arith.constant 0 : index
    %39 = vector.load %arg7[%c0_19, %c0_20] : memref<16x8xf32, #tpu.memory_space<vmem>>, vector<16x8xf32>
    tpu.vector_store %arg7[%c0_19, %c0_20], %38 {strides = array<i32>} : memref<16x8xf32, #tpu.memory_space<vmem>>, vector<16x8xf32>,
    return
  }
  func.func @transform_0(%arg0: i32) -> (i32, i32) {
    %c0_i32 = arith.constant 0 : i32
    %c0_i32_0 = arith.constant 0 : i32
    return %arg0, %c0_i32 : i32, i32
  }
  func.func @transform_1(%arg0: i32) -> (i32, i32) {
    %c0_i32 = arith.constant 0 : i32
    %c0_i32_0 = arith.constant 0 : i32
    %c0_i32_1 = arith.constant 0 : i32
    return %c0_i32, %c0_i32_0 : i32, i32
  }
  func.func @transform_2(%arg0: i32) -> (i32, i32) {
    %c0_i32 = arith.constant 0 : i32
    %c0_i32_0 = arith.constant 0 : i32
    %c0_i32_1 = arith.constant 0 : i32
    return %c0_i32, %c0_i32_0 : i32, i32
  }
  func.func @transform_3(%arg0: i32) -> (i32, i32) {
    %c0_i32 = arith.constant 0 : i32
    %c0_i32_0 = arith.constant 0 : i32
    %c0_i32_1 = arith.constant 0 : i32
    return %c0_i32, %c0_i32_0 : i32, i32
  }
  func.func @transform_4(%arg0: i32) -> (i32, i32) {
    %c0_i32 = arith.constant 0 : i32
    %c0_i32_0 = arith.constant 0 : i32
    %c0_i32_1 = arith.constant 0 : i32
    return %c0_i32, %c0_i32_0 : i32, i32
  }
  func.func @transform_5(%arg0: i32) -> (i32, i32) {
    %c0_i32 = arith.constant 0 : i32
    %c0_i32_0 = arith.constant 0 : i32
    %c0_i32_1 = arith.constant 0 : i32
    return %c0_i32, %c0_i32_0 : i32, i32
  }
  func.func @transform_6(%arg0: i32) -> (i32, i32) {
    %c0_i32 = arith.constant 0 : i32
    %c0_i32_0 = arith.constant 0 : i32
    return %arg0, %c0_i32 : i32, i32
  }
}

</mosaic_0001>

<llo_original>
// kernel: tpu_custom_call.1
$region0: #{tpu_custom_call.1}
  #allocation0 [shape = 'u32[]', space=smem, size = 0x4, offset = 0x4, fixed_abs, tag = 'smem constant byte address 0x4 - core index']
  #allocation1 [shape = 'u32[144,128]{1,0:T(1,128)}', space=vmem, size = 0x12000, scoped, tag = 'internal scratch']
  %s0 = inlined_call_operand.hbm [shape: f32[16,32], index: 0, kind: input, shape index: {}]
  %s1 = inlined_call_operand.hbm [shape: bf16[32,128], index: 1, kind: input, shape index: {}]
  %s2 = inlined_call_operand.hbm [shape: bf16[128,128], index: 2, kind: input, shape index: {}]
  %s3 = inlined_call_operand.hbm [shape: bf16[128,128], index: 3, kind: input, shape index: {}]
  %s4 = inlined_call_operand.hbm [shape: bf16[128,128], index: 4, kind: input, shape index: {}]
  %s5 = inlined_call_operand.vmem [shape: f32[4,128], index: 5, kind: input, shape index: {}]
  %s6 = inlined_call_operand.vmem [shape: f32[16,8], index: 6, kind: output, shape index: {}]
  %s7 = sld [smem:[#allocation0]]
  $region54: #{tpu_custom_call.1} parent=0
    _
  %s9 = ssub.s32 1, %s7
  %s10 = scalar_select 0, %s9, %s7
  $region1: #{tpu_custom_call.1} parent=0
    #allocation2 [shape = 'u8[8192]{0}', space=vmem, size = 0x2000, scoped, tag = 'input window, operand 0, single buffered']
    #allocation3 [shape = 's32[1]{0}', space=sflag, size = 0x4, scoped, tag = 'scoped memory for tpu_custom_call.1']
    #allocation4 [shape = 'u8[8192]{0}', space=vmem, size = 0x2000, scoped, tag = 'input window, operand 1, single buffered']
    #allocation5 [shape = 's32[1]{0}', space=sflag, size = 0x4, scoped, tag = 'scoped memory for tpu_custom_call.1']
    #allocation6 [shape = 'u8[32768]{0}', space=vmem, size = 0x8000, scoped, tag = 'input window, operand 2, single buffered']
    #allocation7 [shape = 'u8[32768]{0}', space=vmem, size = 0x8000, scoped, tag = 'input window, operand 3, single buffered']
    #allocation8 [shape = 's32[1]{0}', space=sflag, size = 0x4, scoped, tag = 'scoped memory for tpu_custom_call.1']
    #allocation9 [shape = 'u8[32768]{0}', space=vmem, size = 0x8000, scoped, tag = 'input window, operand 4, single buffered']
    %11 = vsyncpa [#allocation3], 0
    %12 = vsyncpa [#allocation5], 0
    %13 = vsyncpa [#allocation8], 0
    // Predicated region
    $region2: #{tpu_custom_call.1} parent=1 // pred_check
      _
    $region3: #{tpu_custom_call.1} parent=1 // pred_check_branch
      %15 = sbr.rel (0) target = $region5
    $region4: #{tpu_custom_call.1} parent=1 // pred_region
      %s17 = ssub.s32 256, 256
      %18 = vsyncadd [#allocation3], %s17
      %s19 = sshll.u32 [#allocation2], 4
      %s20 = int_to_ptr.vmem [resolvable:$true] %s19
      %25 = dma.hbm_to_vmem [thread:$0]  %s0, 256, %s20, [#allocation3], 128, 128, 8
    $region5: #{tpu_custom_call.1} parent=1 // pred_fallthru
      _
    // Predicated region
    $region6: #{tpu_custom_call.1} parent=1 // pred_check
      _
    $region7: #{tpu_custom_call.1} parent=1 // pred_check_branch
      %27 = sbr.rel (0) target = $region9
    $region8: #{tpu_custom_call.1} parent=1 // pred_region
      %s29 = ssub.s32 256, 256
      %30 = vsyncadd [#allocation5], %s29
      %s31 = sshll.u32 [#allocation4], 4
      %s32 = int_to_ptr.vmem [resolvable:$true] %s31
      %37 = dma.hbm_to_vmem [thread:$0]  %s1, 256, %s32, [#allocation5], 64, 64, 4
    $region9: #{tpu_custom_call.1} parent=1 // pred_fallthru
      _
    // Predicated region
    $region10: #{tpu_custom_call.1} parent=1 // pred_check
      _
    $region11: #{tpu_custom_call.1} parent=1 // pred_check_branch
      %39 = sbr.rel (0) target = $region13
    $region12: #{tpu_custom_call.1} parent=1 // pred_region
      %s41 = ssub.s32 1024, 1024
      %42 = vsyncadd [#allocation5], %s41
      %s43 = sshll.u32 [#allocation6], 4
      %s44 = int_to_ptr.vmem [resolvable:$true] %s43
      %49 = dma.hbm_to_vmem [thread:$0]  %s2, 1024, %s44, [#allocation5], 64, 64, 4
    $region13: #{tpu_custom_call.1} parent=1 // pred_fallthru
      _
    // Predicated region
    $region14: #{tpu_custom_call.1} parent=1 // pred_check
      _
    $region15: #{tpu_custom_call.1} parent=1 // pred_check_branch
      %51 = sbr.rel (0) target = $region17
    $region16: #{tpu_custom_call.1} parent=1 // pred_region
      %s53 = ssub.s32 1024, 1024
      %54 = vsyncadd [#allocation8], %s53
      %s55 = sshll.u32 [#allocation7], 4
      %s56 = int_to_ptr.vmem [resolvable:$true] %s55
      %61 = dma.hbm_to_vmem [thread:$0]  %s3, 1024, %s56, [#allocation8], 64, 64, 4
    $region17: #{tpu_custom_call.1} parent=1 // pred_fallthru
      _
    // Predicated region
    $region18: #{tpu_custom_call.1} parent=1 // pred_check
      _
    $region19: #{tpu_custom_call.1} parent=1 // pred_check_branch
      %63 = sbr.rel (0) target = $region21
    $region20: #{tpu_custom_call.1} parent=1 // pred_region
      %s65 = ssub.s32 1024, 1024
      %66 = vsyncadd [#allocation8], %s65
      %s67 = sshll.u32 [#allocation9], 4
      %s68 = int_to_ptr.vmem [resolvable:$true] %s67
      %73 = dma.hbm_to_vmem [thread:$0]  %s4, 1024, %s68, [#allocation8], 64, 64, 4
    $region21: #{tpu_custom_call.1} parent=1 // pred_fallthru
      _
    // Predicated region
    $region22: #{tpu_custom_call.1} parent=1 // pred_check
      _
    $region23: #{tpu_custom_call.1} parent=1 // pred_check_branch
      %75 = sbr.rel (0) target = $region25
    $region24: #{tpu_custom_call.1} parent=1 // pred_region
      _
    $region25: #{tpu_custom_call.1} parent=1 // pred_fallthru
      _
    // Predicated region
    $region26: #{tpu_custom_call.1} parent=1 // pred_check
      _
    $region27: #{tpu_custom_call.1} parent=1 // pred_check_branch
      %77 = sbr.rel (0) target = $region29
    $region28: #{tpu_custom_call.1} parent=1 // pred_region
      %78 = dma.done [#allocation3], 256
    $region29: #{tpu_custom_call.1} parent=1 // pred_fallthru
      _
    // Predicated region
    $region30: #{tpu_custom_call.1} parent=1 // pred_check
      _
    $region31: #{tpu_custom_call.1} parent=1 // pred_check_branch
      %80 = sbr.rel (0) target = $region33
    $region32: #{tpu_custom_call.1} parent=1 // pred_region
      %81 = dma.done [#allocation5], 256
    $region33: #{tpu_custom_call.1} parent=1 // pred_fallthru
      _
    // Predicated region
    $region34: #{tpu_custom_call.1} parent=1 // pred_check
      _
    $region35: #{tpu_custom_call.1} parent=1 // pred_check_branch
      %83 = sbr.rel (0) target = $region37
    $region36: #{tpu_custom_call.1} parent=1 // pred_region
      %84 = dma.done [#allocation5], 1024
    $region37: #{tpu_custom_call.1} parent=1 // pred_fallthru
      _
    // Predicated region
    $region38: #{tpu_custom_call.1} parent=1 // pred_check
      _
    $region39: #{tpu_custom_call.1} parent=1 // pred_check_branch
      %86 = sbr.rel (0) target = $region41
    $region40: #{tpu_custom_call.1} parent=1 // pred_region
      %87 = dma.done [#allocation8], 1024
    $region41: #{tpu_custom_call.1} parent=1 // pred_fallthru
      _
    // Predicated region
    $region42: #{tpu_custom_call.1} parent=1 // pred_check
      _
    $region43: #{tpu_custom_call.1} parent=1 // pred_check_branch
      %89 = sbr.rel (0) target = $region45
    $region44: #{tpu_custom_call.1} parent=1 // pred_region
      %90 = dma.done [#allocation8], 1024
    $region45: #{tpu_custom_call.1} parent=1 // pred_fallthru
      _
    %v92 = vld [vmem:[%s5] sm:$0xf]
    %v93 = vld [vmem:[#allocation2] sm:$0xff]
    %v94 = vld [vmem:[#allocation2 + $0x8] sm:$0xff]
    %v95 = vpack.c.bf16 %v94, %v93
    %v96 = vld [vmem:[#allocation4] sm:$0xf]
    %v97 = vld [vmem:[#allocation4 + $0x4] sm:$0xf]
    %v98 = vld [vmem:[#allocation4 + $0x8] sm:$0xf]
    %v99 = vld [vmem:[#allocation4 + $0xc] sm:$0xf]
    %v100 = vlaneseq
    %v101 = vshrl.u32 %v100, 7
    %v102 = vsub.s32 0, %v101
    %v103 = vrot.slane %v92, %v102
    %v108 = vunpack.c.l.b16 %v96
    %v109 = vunpack.c.l.b16 %v97
    %v110 = vunpack.c.l.b16 %v98
    %v111 = vunpack.c.l.b16 %v99
    %v112 = vpack.c.b16 %v109, %v108
    %v113 = vpack.c.b16 %v111, %v110
    %vm116 = vcmask 261120
    %v118 = vsel %vm116, %v95, 0
    %120 = vmatprep.subr.bf16.mxu0 0
    %121 = vmatpush1.bf16.msra.mxu0 %v112
    %122 = vmatprep.subr.bf16.mxu0 0
    %123 = vmatpush1.bf16.msra.mxu0 %v113
    %124 = vmatprep.subr.bf16.mxu0 0
    %125 = vmatpush1.bf16.msra.mxu0 0
    %126 = vmatprep.subr.bf16.mxu0 0
    %127 = vmatpush1.bf16.msra.mxu0 0
    %128 = vmatprep.subr.bf16.mxu0 0
    %129 = vmatpush1.bf16.msra.mxu0 0
    %130 = vmatprep.subr.bf16.mxu0 0
    %131 = vmatpush1.bf16.msra.mxu0 0
    %132 = vmatprep.subr.bf16.mxu0 0
    %133 = vmatpush1.bf16.msra.mxu0 0
    %134 = vmatprep.subr.bf16.mxu0 0
    %135 = vmatpush1.bf16.msra.mxu0 0
    %136 = vmatprep.subr.bf16.mxu0 0
    %137 = vmatpush1.bf16.msra.mxu0 0
    %138 = vmatprep.subr.bf16.mxu0 0
    %139 = vmatpush1.bf16.msra.mxu0 0
    %140 = vmatprep.subr.bf16.mxu0 0
    %141 = vmatpush1.bf16.msra.mxu0 0
    %142 = vmatprep.subr.bf16.mxu0 0
    %143 = vmatpush1.bf16.msra.mxu0 0
    %144 = vmatprep.subr.bf16.mxu0 0
    %145 = vmatpush1.bf16.msra.mxu0 0
    %146 = vmatprep.subr.bf16.mxu0 0
    %147 = vmatpush1.bf16.msra.mxu0 0
    %148 = vmatprep.subr.bf16.mxu0 0
    %149 = vmatpush1.bf16.msra.mxu0 0
    %150 = vmatprep.subr.bf16.mxu0 0
    %151 = vmatpush1.bf16.msra.mxu0 0
    %152 = vmatprep.mubr.bf16.mxu0 0
    %153 = vmatmul.mubr.bf16.gmra.mrb[0].mxu0 %v118
    %v154 = vpop.f32.mrb[0].mxu0
    %v155 = vadd.f32 %v103, %v154
    %v156 = vpop.f32.mrb[0].mxu0
    %v157 = vpop.f32.mrb[0].mxu0
    %v158 = vadd.f32 %v103, %v157
    %v159 = vpop.f32.mrb[0].mxu0
    %160 = vdwg.mxu0
    %v161 = vpack.c.bf16 %v158, %v155
    %v162 = vmax.bf16 %v161, 0
    %v163 = vld [vmem:[#allocation6] sm:$0xf]
    %v164 = vld [vmem:[#allocation6 + $0x4] sm:$0xf]
    %v165 = vld [vmem:[#allocation6 + $0x8] sm:$0xf]
    %v166 = vld [vmem:[#allocation6 + $0xc] sm:$0xf]
    %v167 = vld [vmem:[#allocation6 + $0x10] sm:$0xf]
    %v168 = vld [vmem:[#allocation6 + $0x14] sm:$0xf]
    %v169 = vld [vmem:[#allocation6 + $0x18] sm:$0xf]
    %v170 = vld [vmem:[#allocation6 + $0x1c] sm:$0xf]
    %v171 = vld [vmem:[#allocation6 + $0x20] sm:$0xf]
    %v172 = vld [vmem:[#allocation6 + $0x24] sm:$0xf]
    %v173 = vld [vmem:[#allocation6 + $0x28] sm:$0xf]
    %v174 = vld [vmem:[#allocation6 + $0x2c] sm:$0xf]
    %v175 = vld [vmem:[#allocation6 + $0x30] sm:$0xf]
    %v176 = vld [vmem:[#allocation6 + $0x34] sm:$0xf]
    %v177 = vld [vmem:[#allocation6 + $0x38] sm:$0xf]
    %v178 = vld [vmem:[#allocation6 + $0x3c] sm:$0xf]
    %v179 = vlaneseq
    %v180 = vshrl.u32 %v179, 7
    %v181 = vsub.s32 1, %v180
    %v182 = vrot.slane %v92, %v181
    %v199 = vunpack.c.l.b16 %v163
    %v200 = vunpack.c.l.b16 %v164
    %v201 = vunpack.c.l.b16 %v165
    %v202 = vunpack.c.l.b16 %v166
    %v203 = vunpack.c.l.b16 %v167
    %v204 = vunpack.c.l.b16 %v168
    %v205 = vunpack.c.l.b16 %v169
    %v206 = vunpack.c.l.b16 %v170
    %v207 = vunpack.c.l.b16 %v171
    %v208 = vunpack.c.l.b16 %v172
    %v209 = vunpack.c.l.b16 %v173
    %v210 = vunpack.c.l.b16 %v174
    %v211 = vunpack.c.l.b16 %v175
    %v212 = vunpack.c.l.b16 %v176
    %v213 = vunpack.c.l.b16 %v177
    %v214 = vunpack.c.l.b16 %v178
    %v215 = vpack.c.b16 %v200, %v199
    %v216 = vpack.c.b16 %v202, %v201
    %v217 = vpack.c.b16 %v204, %v203
    %v218 = vpack.c.b16 %v206, %v205
    %v219 = vpack.c.b16 %v208, %v207
    %v220 = vpack.c.b16 %v210, %v209
    %v221 = vpack.c.b16 %v212, %v211
    %v222 = vpack.c.b16 %v214, %v213
    %231 = vmatprep.subr.bf16.mxu0 0
    %232 = vmatpush1.bf16.msra.mxu0 %v215
    %233 = vmatprep.subr.bf16.mxu0 0
    %234 = vmatpush1.bf16.msra.mxu0 %v216
    %235 = vmatprep.subr.bf16.mxu0 0
    %236 = vmatpush1.bf16.msra.mxu0 %v217
    %237 = vmatprep.subr.bf16.mxu0 0
    %238 = vmatpush1.bf16.msra.mxu0 %v218
    %239 = vmatprep.subr.bf16.mxu0 0
    %240 = vmatpush1.bf16.msra.mxu0 %v219
    %241 = vmatprep.subr.bf16.mxu0 0
    %242 = vmatpush1.bf16.msra.mxu0 %v220
    %243 = vmatprep.subr.bf16.mxu0 0
    %244 = vmatpush1.bf16.msra.mxu0 %v221
    %245 = vmatprep.subr.bf16.mxu0 0
    %246 = vmatpush1.bf16.msra.mxu0 %v222
    %247 = vmatprep.subr.bf16.mxu0 0
    %248 = vmatpush1.bf16.msra.mxu0 0
    %249 = vmatprep.subr.bf16.mxu0 0
    %250 = vmatpush1.bf16.msra.mxu0 0
    %251 = vmatprep.subr.bf16.mxu0 0
    %252 = vmatpush1.bf16.msra.mxu0 0
    %253 = vmatprep.subr.bf16.mxu0 0
    %254 = vmatpush1.bf16.msra.mxu0 0
    %255 = vmatprep.subr.bf16.mxu0 0
    %256 = vmatpush1.bf16.msra.mxu0 0
    %257 = vmatprep.subr.bf16.mxu0 0
    %258 = vmatpush1.bf16.msra.mxu0 0
    %259 = vmatprep.subr.bf16.mxu0 0
    %260 = vmatpush1.bf16.msra.mxu0 0
    %261 = vmatprep.subr.bf16.mxu0 0
    %262 = vmatpush1.bf16.msra.mxu0 0
    %263 = vmatprep.mubr.bf16.mxu0 0
    %264 = vmatmul.mubr.bf16.gmra.mrb[0].mxu0 %v162
    %v265 = vpop.f32.mrb[0].mxu0
    %v266 = vadd.f32 %v182, %v265
    %v267 = vpop.f32.mrb[0].mxu0
    %v268 = vpop.f32.mrb[0].mxu0
    %v269 = vadd.f32 %v182, %v268
    %v270 = vpop.f32.mrb[0].mxu0
    %271 = vdwg.mxu0
    %v272 = vpack.c.bf16 %v269, %v266
    %v273 = vmax.bf16 %v272, 0
    %v274 = vld [vmem:[#allocation7] sm:$0xf]
    %v275 = vld [vmem:[#allocation7 + $0x4] sm:$0xf]
    %v276 = vld [vmem:[#allocation7 + $0x8] sm:$0xf]
    %v277 = vld [vmem:[#allocation7 + $0xc] sm:$0xf]
    %v278 = vld [vmem:[#allocation7 + $0x10] sm:$0xf]
    %v279 = vld [vmem:[#allocation7 + $0x14] sm:$0xf]
    %v280 = vld [vmem:[#allocation7 + $0x18] sm:$0xf]
    %v281 = vld [vmem:[#allocation7 + $0x1c] sm:$0xf]
    %v282 = vld [vmem:[#allocation7 + $0x20] sm:$0xf]
    %v283 = vld [vmem:[#allocation7 + $0x24] sm:$0xf]
    %v284 = vld [vmem:[#allocation7 + $0x28] sm:$0xf]
    %v285 = vld [vmem:[#allocation7 + $0x2c] sm:$0xf]
    %v286 = vld [vmem:[#allocation7 + $0x30] sm:$0xf]
    %v287 = vld [vmem:[#allocation7 + $0x34] sm:$0xf]
    %v288 = vld [vmem:[#allocation7 + $0x38] sm:$0xf]
    %v289 = vld [vmem:[#allocation7 + $0x3c] sm:$0xf]
    %v290 = vlaneseq
    %v291 = vshrl.u32 %v290, 7
    %v292 = vsub.s32 2, %v291
    %v293 = vrot.slane %v92, %v292
    %v310 = vunpack.c.l.b16 %v274
    %v311 = vunpack.c.l.b16 %v275
    %v312 = vunpack.c.l.b16 %v276
    %v313 = vunpack.c.l.b16 %v277
    %v314 = vunpack.c.l.b16 %v278
    %v315 = vunpack.c.l.b16 %v279
    %v316 = vunpack.c.l.b16 %v280
    %v317 = vunpack.c.l.b16 %v281
    %v318 = vunpack.c.l.b16 %v282
    %v319 = vunpack.c.l.b16 %v283
    %v320 = vunpack.c.l.b16 %v284
    %v321 = vunpack.c.l.b16 %v285
    %v322 = vunpack.c.l.b16 %v286
    %v323 = vunpack.c.l.b16 %v287
    %v324 = vunpack.c.l.b16 %v288
    %v325 = vunpack.c.l.b16 %v289
    %v326 = vpack.c.b16 %v311, %v310
    %v327 = vpack.c.b16 %v313, %v312
    %v328 = vpack.c.b16 %v315, %v314
    %v329 = vpack.c.b16 %v317, %v316
    %v330 = vpack.c.b16 %v319, %v318
    %v331 = vpack.c.b16 %v321, %v320
    %v332 = vpack.c.b16 %v323, %v322
    %v333 = vpack.c.b16 %v325, %v324
    %342 = vmatprep.subr.bf16.mxu0 0
    %343 = vmatpush1.bf16.msra.mxu0 %v326
    %344 = vmatprep.subr.bf16.mxu0 0
    %345 = vmatpush1.bf16.msra.mxu0 %v327
    %346 = vmatprep.subr.bf16.mxu0 0
    %347 = vmatpush1.bf16.msra.mxu0 %v328
    %348 = vmatprep.subr.bf16.mxu0 0
    %349 = vmatpush1.bf16.msra.mxu0 %v329
    %350 = vmatprep.subr.bf16.mxu0 0
    %351 = vmatpush1.bf16.msra.mxu0 %v330
    %352 = vmatprep.subr.bf16.mxu0 0
    %353 = vmatpush1.bf16.msra.mxu0 %v331
    %354 = vmatprep.subr.bf16.mxu0 0
    %355 = vmatpush1.bf16.msra.mxu0 %v332
    %356 = vmatprep.subr.bf16.mxu0 0
    %357 = vmatpush1.bf16.msra.mxu0 %v333
    %358 = vmatprep.subr.bf16.mxu0 0
    %359 = vmatpush1.bf16.msra.mxu0 0
    %360 = vmatprep.subr.bf16.mxu0 0
    %361 = vmatpush1.bf16.msra.mxu0 0
    %362 = vmatprep.subr.bf16.mxu0 0
    %363 = vmatpush1.bf16.msra.mxu0 0
    %364 = vmatprep.subr.bf16.mxu0 0
    %365 = vmatpush1.bf16.msra.mxu0 0
    %366 = vmatprep.subr.bf16.mxu0 0
    %367 = vmatpush1.bf16.msra.mxu0 0
    %368 = vmatprep.subr.bf16.mxu0 0
    %369 = vmatpush1.bf16.msra.mxu0 0
    %370 = vmatprep.subr.bf16.mxu0 0
    %371 = vmatpush1.bf16.msra.mxu0 0
    %372 = vmatprep.subr.bf16.mxu0 0
    %373 = vmatpush1.bf16.msra.mxu0 0
    %374 = vmatprep.mubr.bf16.mxu0 0
    %375 = vmatmul.mubr.bf16.gmra.mrb[0].mxu0 %v273
    %v376 = vpop.f32.mrb[0].mxu0
    %v377 = vadd.f32 %v293, %v376
    %v378 = vpop.f32.mrb[0].mxu0
    %v379 = vpop.f32.mrb[0].mxu0
    %v380 = vadd.f32 %v293, %v379
    %v381 = vpop.f32.mrb[0].mxu0
    %382 = vdwg.mxu0
    %v383 = vpack.c.bf16 %v380, %v377
    %v384 = vmax.bf16 %v383, 0
    %v385 = vld [vmem:[#allocation9] sm:$0xf]
    %v386 = vld [vmem:[#allocation9 + $0x4] sm:$0xf]
    %v387 = vld [vmem:[#allocation9 + $0x8] sm:$0xf]
    %v388 = vld [vmem:[#allocation9 + $0xc] sm:$0xf]
    %v389 = vld [vmem:[#allocation9 + $0x10] sm:$0xf]
    %v390 = vld [vmem:[#allocation9 + $0x14] sm:$0xf]
    %v391 = vld [vmem:[#allocation9 + $0x18] sm:$0xf]
    %v392 = vld [vmem:[#allocation9 + $0x1c] sm:$0xf]
    %v393 = vld [vmem:[#allocation9 + $0x20] sm:$0xf]
    %v394 = vld [vmem:[#allocation9 + $0x24] sm:$0xf]
    %v395 = vld [vmem:[#allocation9 + $0x28] sm:$0xf]
    %v396 = vld [vmem:[#allocation9 + $0x2c] sm:$0xf]
    %v397 = vld [vmem:[#allocation9 + $0x30] sm:$0xf]
    %v398 = vld [vmem:[#allocation9 + $0x34] sm:$0xf]
    %v399 = vld [vmem:[#allocation9 + $0x38] sm:$0xf]
    %v400 = vld [vmem:[#allocation9 + $0x3c] sm:$0xf]
    %v401 = vlaneseq
    %v402 = vshrl.u32 %v401, 7
    %v403 = vsub.s32 3, %v402
    %v404 = vrot.slane %v92, %v403
    %v421 = vunpack.c.l.b16 %v385
    %v422 = vunpack.c.l.b16 %v386
    %v423 = vunpack.c.l.b16 %v387
    %v424 = vunpack.c.l.b16 %v388
    %v425 = vunpack.c.l.b16 %v389
    %v426 = vunpack.c.l.b16 %v390
    %v427 = vunpack.c.l.b16 %v391
    %v428 = vunpack.c.l.b16 %v392
    %v429 = vunpack.c.l.b16 %v393
    %v430 = vunpack.c.l.b16 %v394
    %v431 = vunpack.c.l.b16 %v395
    %v432 = vunpack.c.l.b16 %v396
    %v433 = vunpack.c.l.b16 %v397
    %v434 = vunpack.c.l.b16 %v398
    %v435 = vunpack.c.l.b16 %v399
    %v436 = vunpack.c.l.b16 %v400
    %v437 = vpack.c.b16 %v422, %v421
    %v438 = vpack.c.b16 %v424, %v423
    %v439 = vpack.c.b16 %v426, %v425
    %v440 = vpack.c.b16 %v428, %v427
    %v441 = vpack.c.b16 %v430, %v429
    %v442 = vpack.c.b16 %v432, %v431
    %v443 = vpack.c.b16 %v434, %v433
    %v444 = vpack.c.b16 %v436, %v435
    %453 = vmatprep.subr.bf16.mxu0 0
    %454 = vmatpush1.bf16.msra.mxu0 %v437
    %455 = vmatprep.subr.bf16.mxu0 0
    %456 = vmatpush1.bf16.msra.mxu0 %v438
    %457 = vmatprep.subr.bf16.mxu0 0
    %458 = vmatpush1.bf16.msra.mxu0 %v439
    %459 = vmatprep.subr.bf16.mxu0 0
    %460 = vmatpush1.bf16.msra.mxu0 %v440
    %461 = vmatprep.subr.bf16.mxu0 0
    %462 = vmatpush1.bf16.msra.mxu0 %v441
    %463 = vmatprep.subr.bf16.mxu0 0
    %464 = vmatpush1.bf16.msra.mxu0 %v442
    %465 = vmatprep.subr.bf16.mxu0 0
    %466 = vmatpush1.bf16.msra.mxu0 %v443
    %467 = vmatprep.subr.bf16.mxu0 0
    %468 = vmatpush1.bf16.msra.mxu0 %v444
    %469 = vmatprep.subr.bf16.mxu0 0
    %470 = vmatpush1.bf16.msra.mxu0 0
    %471 = vmatprep.subr.bf16.mxu0 0
    %472 = vmatpush1.bf16.msra.mxu0 0
    %473 = vmatprep.subr.bf16.mxu0 0
    %474 = vmatpush1.bf16.msra.mxu0 0
    %475 = vmatprep.subr.bf16.mxu0 0
    %476 = vmatpush1.bf16.msra.mxu0 0
    %477 = vmatprep.subr.bf16.mxu0 0
    %478 = vmatpush1.bf16.msra.mxu0 0
    %479 = vmatprep.subr.bf16.mxu0 0
    %480 = vmatpush1.bf16.msra.mxu0 0
    %481 = vmatprep.subr.bf16.mxu0 0
    %482 = vmatpush1.bf16.msra.mxu0 0
    %483 = vmatprep.subr.bf16.mxu0 0
    %484 = vmatpush1.bf16.msra.mxu0 0
    %485 = vmatprep.mubr.bf16.mxu0 0
    %486 = vmatmul.mubr.bf16.gmra.mrb[0].mxu0 %v384
    %v487 = vpop.f32.mrb[0].mxu0
    %v488 = vadd.f32 %v404, %v487
    %v489 = vpop.f32.mrb[0].mxu0
    %v490 = vpop.f32.mrb[0].mxu0
    %v491 = vadd.f32 %v404, %v490
    %v492 = vpop.f32.mrb[0].mxu0
    %493 = vdwg.mxu0
    %v494 = vsub.f32 0.0, %v488
    %v495 = vsub.f32 0.0, %v491
    %v496 = vmul.f32 %v494, 1.442695
    %v497 = vpow.pop %v496
    %v498 = vmul.f32 %v495, 1.442695
    %v499 = vpow.pop %v498
    %v500 = vadd.f32 %v497, 1.0
    %v501 = vadd.f32 %v499, 1.0
    %v502 = vrcp.pop %v500
    %v503 = vrcp.pop %v501
    %vm504 = vcmask 64512
    %505 = vst.msk [vmem:[%s6] sm:$0xff] %vm504, %v502
    %506 = vst.msk [vmem:[%s6 + $0x8] sm:$0xff] %vm504, %v503
    // Predicated region
    $region46: #{tpu_custom_call.1} parent=1 // pred_check
      _
    $region47: #{tpu_custom_call.1} parent=1 // pred_check_branch
      %508 = sbr.rel (0) target = $region49
    $region48: #{tpu_custom_call.1} parent=1 // pred_region
      _
    $region49: #{tpu_custom_call.1} parent=1 // pred_fallthru
      _
    // Predicated region
    $region50: #{tpu_custom_call.1} parent=1 // pred_check
      _
    $region51: #{tpu_custom_call.1} parent=1 // pred_check_branch
      %510 = sbr.rel (0) target = $region53
    $region52: #{tpu_custom_call.1} parent=1 // pred_region
      _
    $region53: #{tpu_custom_call.1} parent=1 // pred_fallthru
      _
    %511 = vsyncpa [#allocation3], 1
    %512 = vsyncpa [#allocation5], 1
    %513 = vsyncpa [#allocation8], 1

</llo_original>
